<compile_context>
chip_gen: v6e
topology: v6e:2x2x1
jax: 0.10.0
libtpu: 0.0.40
codegen_flags: <defaults>
</compile_context>

<pallas_src>
import functools

import jax
import jax.numpy as jnp
from jax import lax
from jax.experimental import pallas as pl
from jax.experimental.pallas import tpu as pltpu

LANES = 128
SUBLANES = 8
_TILE_R = 4096                          # rows per block in the tiled path (2 MiB f32)
_FUSED_MAX_BYTES = 8 * 1024 * 1024      # f32 working-set threshold for the fused path
_VMEM_LIMIT = 32 * 1024 * 1024          # safe on v5e/v6e (128 MiB) and v7x (64 MiB)


def _num_tensorcores() -> int:
    """Best-effort TensorCore count (2 on v7x). Defaults to 1 (v5e/v6e)."""
    try:
        info = pltpu.get_tpu_info()
    except Exception:
        return 1
    for attr in ("num_cores", "core_count", "tensorcore_count", "num_tensorcores"):
        v = getattr(info, attr, None)
        if isinstance(v, int) and v > 0:
            return min(int(v), 2)
    return 1


# ----------------------------------------------------------------------------
# Fused single-block kernel (whole slab resident in VMEM).
# ----------------------------------------------------------------------------
def _fused_kernel(x_ref, o_ref, *, pre_scale_add, post_scale):
    x = x_ref[...].astype(jnp.float32)
    # tanh odd + monotone -> tanh(max|x|) == max|tanh(x)|: no slab tanh temp
    # lives across the reduction, peak VMEM drops from ~3x to ~2x slab.
    m = jnp.tanh(jnp.max(jnp.abs(x)))            # all-zero input -> NaN, as in PyTorch
    c = pre_scale_add / m                        # = 0.5*scale / m, exact scalar divide
    r = jnp.round(jnp.tanh(x) * c + pre_scale_add)
    o_ref[...] = (r * post_scale - 1.0).astype(o_ref.dtype)


# ----------------------------------------------------------------------------
# Tiled path, pass 1: per-core per-lane max(|x|) (no tanh over the data).
# ----------------------------------------------------------------------------
def _max_abs_kernel(x_ref, m_ref, acc_ref, *, steps, num_blocks, tile_r,
                    valid_rows_last):
    c = pl.program_id(0)
    j = pl.program_id(1)

    @pl.when(j == 0)
    def _():
        acc_ref[...] = jnp.zeros_like(acc_ref)   # |x| >= 0, so 0 is the identity

    a = jnp.abs(x_ref[...].astype(jnp.float32))

    if valid_rows_last != tile_r:
        # Trailing block only covers `valid_rows_last` rows of the unpadded
        # input; rows past the array end hold garbage from the OOB read.
        blk = jnp.minimum(c * steps + j, num_blocks - 1)
        limit = jnp.where(blk == num_blocks - 1, valid_rows_last, tile_r)
        row = lax.broadcasted_iota(jnp.int32, (tile_r, LANES), 0)
        a = jnp.where(row < limit, a, 0.0)

    # Fold the (tile_r, 128) block into per-(sublane, lane) maxima: pure VPU.
    acc_ref[...] = jnp.maximum(acc_ref[...],
                               jnp.max(a.reshape(-1, SUBLANES, LANES), axis=0))

    @pl.when(j == pl.num_programs(1) - 1)
    def _():
        m_ref[...] = acc_ref[...].reshape(1, SUBLANES, LANES)


# ----------------------------------------------------------------------------
# Tiled path, pass 2: elementwise quantization with a precomputed SMEM scalar.
# ----------------------------------------------------------------------------
def _quantize_kernel(c_ref, x_ref, o_ref, *, pre_scale_add, post_scale):
    c = c_ref[0, 0]                              # = 0.5*scale / max|tanh(x)|
    t = jnp.tanh(x_ref[...].astype(jnp.float32))
    r = jnp.round(t * c + pre_scale_add)
    o_ref[...] = (r * post_scale - 1.0).astype(o_ref.dtype)


# ----------------------------------------------------------------------------
# Wrapper
# ----------------------------------------------------------------------------
def weight_quantize(x, w_bits, *, force_tiled=False):
    """Pallas TPU implementation of quantized_dorefa.weight_quantize.forward."""
    if w_bits == 32:
        return x
    assert w_bits != 1, "Binary quantization is not supported"

    orig_shape = x.shape
    orig_dtype = x.dtype
    scale = float(2 ** w_bits - 1)
    pre_scale_add = 0.5 * scale        # folded:  round(t * (0.5*scale/m) + 0.5*scale)
    post_scale = 2.0 / scale           #          * (2/scale) - 1

    flat = x.reshape(-1)               # keep original dtype: casts happen in-kernel
    n = flat.shape[0]
    pad = (-n) % LANES
    if pad:
        # TODO(synk): lane-ragged tensors (n % 128 != 0) still cost one pad copy and
        # one output slice; removing those needs a 1-D / manual-DMA tail path.
        flat = jnp.pad(flat, (0, pad))   # zeros never win max(|x|)
    rows = (n + pad) // LANES
    x2d = flat.reshape(rows, LANES)

    slab_f32_bytes = rows * LANES * 4
    use_fused = (not force_tiled) and (slab_f32_bytes <= _FUSED_MAX_BYTES)

    if use_fused:
        # Single launch, single HBM read+write in the original dtype.
        q2d = pl.pallas_call(
            functools.partial(_fused_kernel, pre_scale_add=pre_scale_add,
                              post_scale=post_scale),
            out_shape=jax.ShapeDtypeStruct((rows, LANES), orig_dtype),
            in_specs=[pl.BlockSpec(memory_space=pltpu.MemorySpace.VMEM)],
            out_specs=pl.BlockSpec(memory_space=pltpu.MemorySpace.VMEM),
            compiler_params=pltpu.CompilerParams(vmem_limit_bytes=_VMEM_LIMIT),
        )(x2d)
    else:
        # Round small tiles up to 32 rows so block shapes stay sublane-tile
        # aligned for every supported dtype (f32/bf16/int8).
        tile_r = min(_TILE_R, -(-rows // 32) * 32)
        num_blocks = pl.cdiv(rows, tile_r)
        valid_rows_last = rows - (num_blocks - 1) * tile_r
        ncores = _num_tensorcores()
        steps = pl.cdiv(num_blocks, ncores)

        def _p1_in_map(c, j):
            # Clamp so every (c, j) maps to a valid block; re-maxing the same
            # block is harmless (max is idempotent, last block is masked).
            return (jnp.minimum(c * steps + j, num_blocks - 1), 0)

        # ---- pass 1: per-core per-lane max(|x|) ----
        partial_max = pl.pallas_call(
            functools.partial(_max_abs_kernel, steps=steps, num_blocks=num_blocks,
                              tile_r=tile_r, valid_rows_last=valid_rows_last),
            out_shape=jax.ShapeDtypeStruct((ncores, SUBLANES, LANES), jnp.float32),
            grid=(ncores, steps),
            in_specs=[pl.BlockSpec((tile_r, LANES), _p1_in_map)],
            out_specs=pl.BlockSpec((1, SUBLANES, LANES), lambda c, j: (c, 0, 0)),
            scratch_shapes=[pltpu.VMEM((SUBLANES, LANES), jnp.float32)],
            compiler_params=pltpu.CompilerParams(
                dimension_semantics=("parallel", "arbitrary"),
                vmem_limit_bytes=_VMEM_LIMIT),
        )(x2d)

        # ---- tiny combine in plain JAX: one scalar into SMEM for pass 2 ----
        m = jnp.tanh(jnp.max(partial_max))          # tanh(max|x|) == max|tanh(x)|
        c_scalar = (pre_scale_add / m).astype(jnp.float32).reshape(1, 1)

        # ---- pass 2: purely elementwise quantization ----
        q2d = pl.pallas_call(
            functools.partial(_quantize_kernel, pre_scale_add=pre_scale_add,
                              post_scale=post_scale),
            out_shape=jax.ShapeDtypeStruct((rows, LANES), orig_dtype),
            grid=(num_blocks,),
            in_specs=[
                pl.BlockSpec(memory_space=pltpu.MemorySpace.SMEM),
                pl.BlockSpec((tile_r, LANES), lambda i: (i, 0)),
            ],
            out_specs=pl.BlockSpec((tile_r, LANES), lambda i: (i, 0)),
            compiler_params=pltpu.CompilerParams(
                dimension_semantics=("parallel",),
                vmem_limit_bytes=_VMEM_LIMIT),
        )(c_scalar, x2d)

    flat_out = q2d.reshape(-1)
    if pad:
        flat_out = flat_out[:n]
    return flat_out.reshape(orig_shape)


# ----------------------------------------------------------------------------
# Pure-JAX reference (mirrors the PyTorch forward) + tolerant checker.
# ----------------------------------------------------------------------------
def _reference(x, w_bits):
    if w_bits == 32:
        return x
    t = jnp.tanh(x.astype(jnp.float32))
    q = t / 2.0 / jnp.max(jnp.abs(t)) + 0.5
    scale = float(2 ** w_bits - 1)
    q = jnp.round(q * scale) / scale
    return (2.0 * q - 1.0).astype(x.dtype)


def _assert_close(out, ref, w_bits, tol=1e-5):
    # Bit-exact (up to `tol`) except rare round-to-even ties that may flip by
    # exactly one quantization level under fp reassociation.
    step = 2.0 / float(2 ** w_bits - 1)
    diff = jnp.abs(out.astype(jnp.float32) - ref.astype(jnp.float32))
    exact = diff <= tol
    tie_flip = jnp.abs(diff - step) <= tol
    assert bool(jnp.all(exact | tie_flip)), "mismatch vs reference"
    assert float(jnp.mean(1.0 - exact.astype(jnp.float32))) <= 0.01, \
        "too many mismatches vs reference"


if __name__ == "__main__":
    w_bits = 4

    # Small conv-style weight (O, I, KH, KW), lane-ragged (288 elems): fused path.
    w = jax.random.normal(jax.random.PRNGKey(0), (8, 4, 3, 3), dtype=jnp.float32)
    out = jax.block_until_ready(weight_quantize(w, w_bits))
    assert out.shape == w.shape and out.dtype == w.dtype
    _assert_close(out, _reference(w, w_bits), w_bits)

    # Lane-aligned tensor (1152 = 9*128, no pad / no slice), forced tiled two-pass path.
    w2 = jax.random.normal(jax.random.PRNGKey(1), (16, 8, 3, 3), dtype=jnp.float32)
    out2 = jax.block_until_ready(weight_quantize(w2, w_bits, force_tiled=True))
    assert out2.shape == w2.shape and out2.dtype == w2.dtype
    _assert_close(out2, _reference(w2, w_bits), w_bits)

    # bf16 weights: original dtype flows through the kernels (half the HBM bytes).
    w3 = jax.random.normal(jax.random.PRNGKey(2), (16, 8, 3, 3), dtype=jnp.bfloat16)
    out3 = jax.block_until_ready(weight_quantize(w3, w_bits))
    assert out3.shape == w3.shape and out3.dtype == w3.dtype
    _assert_close(out3, _reference(w3, w_bits), w_bits, tol=8e-3)

    out3t = jax.block_until_ready(weight_quantize(w3, w_bits, force_tiled=True))
    assert out3t.shape == w3.shape and out3t.dtype == w3.dtype
    _assert_close(out3t, _reference(w3, w_bits), w_bits, tol=8e-3)

    # w_bits == 32 pass-through path.
    out32 = jax.block_until_ready(weight_quantize(w, 32))
    assert jnp.array_equal(out32, w)

    print("KERNEL_OK")
</pallas_src>

<mosaic_0001>
module attributes {stable_mosaic.version = 11 : i64} {
  func.func @_fused_kernel(%arg0: memref<3x128xf32, #tpu.memory_space<vmem>>, %arg1: memref<3x128xf32, #tpu.memory_space<vmem>>) attributes {dimension_semantics = [], scalar_prefetch = 0 : i64, scratch_operands = 0 : i64, tpu.core_type = #tpu.core_type<tc>} {
    %c0 = arith.constant 0 : index
    %c0_0 = arith.constant 0 : index
    %0 = vector.load %arg0[%c0, %c0_0] : memref<3x128xf32, #tpu.memory_space<vmem>>, vector<3x128xf32>
    %1 = math.absf %0 : vector<3x128xf32>
    %2 = vector.shape_cast %1 : vector<3x128xf32> to vector<1x3x128xf32>
    %cst = arith.constant dense<0xFF800000> : vector<1xf32>
    %3 = vector.multi_reduction <maximumf>, %2, %cst [1, 2] : vector<1x3x128xf32> to vector<1xf32>
    %4 = vector.shape_cast %3 : vector<1xf32> to vector<1x1x1xf32>
    %5 = vector.extract %4[0, 0, 0] : f32 from vector<1x1x1xf32>
    %6 = math.tanh %5 : f32
    %cst_1 = arith.constant 7.500000e+00 : f32
    %7 = arith.divf %cst_1, %6 : f32
    %8 = math.tanh %0 : vector<3x128xf32>
    %9 = vector.broadcast %7 : f32 to vector<3x128xf32>
    %10 = arith.mulf %8, %9 : vector<3x128xf32>
    %cst_2 = arith.constant 7.500000e+00 : f32
    %11 = vector.broadcast %cst_2 : f32 to vector<3x128xf32>
    %12 = arith.addf %10, %11 : vector<3x128xf32>
    %13 = math.roundeven %12 : vector<3x128xf32>
    %cst_3 = arith.constant 0.13333334 : f32
    %14 = vector.broadcast %cst_3 : f32 to vector<3x128xf32>
    %15 = arith.mulf %13, %14 : vector<3x128xf32>
    %cst_4 = arith.constant 1.000000e+00 : f32
    %16 = vector.broadcast %cst_4 : f32 to vector<3x128xf32>
    %17 = arith.subf %15, %16 : vector<3x128xf32>
    %c0_5 = arith.constant 0 : index
    %c0_6 = arith.constant 0 : index
    %18 = vector.load %arg1[%c0_5, %c0_6] : memref<3x128xf32, #tpu.memory_space<vmem>>, vector<3x128xf32>
    tpu.vector_store %arg1[%c0_5, %c0_6], %17 {strides = array<i32>} : memref<3x128xf32, #tpu.memory_space<vmem>>, vector<3x128xf32>,
    return
  }
}

</mosaic_0001>

<llo_original>
// kernel: tpu_custom_call.1
$region0: #{tpu_custom_call.1}
  #allocation0 [shape = 'u32[]', space=smem, size = 0x4, offset = 0x4, fixed_abs, tag = 'smem constant byte address 0x4 - core index']
  #allocation1 [shape = 'u32[144,128]{1,0:T(1,128)}', space=vmem, size = 0x12000, scoped, tag = 'internal scratch']
  %s0 = inlined_call_operand.hbm [shape: f32[3,128], index: 0, kind: input, shape index: {}]
  %s1 = inlined_call_operand.hbm [shape: f32[3,128], index: 1, kind: output, shape index: {}]
  %s2 = sld [smem:[#allocation0]]
  $region18: #{tpu_custom_call.1} parent=0
    _
  %s4 = ssub.s32 1, %s2
  %s5 = scalar_select 0, %s4, %s2
  $region1: #{tpu_custom_call.1} parent=0
    #allocation2 [shape = 'u8[2048]{0}', space=vmem, size = 0x800, scoped, tag = 'input window, operand 0, single buffered']
    #allocation3 [shape = 's32[1]{0}', space=sflag, size = 0x4, scoped, tag = 'scoped memory for tpu_custom_call.1']
    #allocation4 [shape = 's32[1]{0}', space=sflag, size = 0x4, scoped, tag = 'scoped memory for tpu_custom_call.1']
    #allocation5 [shape = 'u8[2048]{0}', space=vmem, size = 0x800, scoped, tag = 'output window, operand 0, single buffered']
    %6 = vsyncpa [#allocation3], 0
    %7 = vsyncpa [#allocation4], 0
    // Predicated region
    $region2: #{tpu_custom_call.1} parent=1 // pred_check
      _
    $region3: #{tpu_custom_call.1} parent=1 // pred_check_branch
      %9 = sbr.rel (0) target = $region5
    $region4: #{tpu_custom_call.1} parent=1 // pred_region
      %s11 = ssub.s32 64, 64
      %12 = vsyncadd [#allocation3], %s11
      %s14 = sshll.u32 [#allocation2], 4
      %s15 = int_to_ptr.vmem [resolvable:$true] %s14
      %17 = dma.hbm_to_vmem [thread:$0]  %s0, 64, %s15, [#allocation3]
    $region5: #{tpu_custom_call.1} parent=1 // pred_fallthru
      _
    // Predicated region
    $region6: #{tpu_custom_call.1} parent=1 // pred_check
      _
    $region7: #{tpu_custom_call.1} parent=1 // pred_check_branch
      %19 = sbr.rel (0) target = $region9
    $region8: #{tpu_custom_call.1} parent=1 // pred_region
      %20 = dma.done [#allocation3], 64
    $region9: #{tpu_custom_call.1} parent=1 // pred_fallthru
      _
    %v21 = vld [vmem:[#allocation2] sm:$0x7]
    %v22 = vand.u32 2147483647, %v21
    %vm23 = vcmask 1042432
    %v24 = vsel %vm23, %v22, -inf
    %25 = vmax.xlane.f32.xlu0 %v24
    %v26 = vpop.xlane.xlu0 %25
    %v27 = vrot.slane %v26, 4
    %v28 = vmax.f32 %v26, %v27
    %v29 = vrot.slane %v28, 2
    %v30 = vmax.f32 %v28, %v29
    %v31 = vrot.slane %v30, 1
    %v32 = vmax.f32 %v30, %v31
    %s33 = vtos %v32
    %v34 = vstv %s33
    %v35 = vtanh.pop %v34
    %s36 = vtos %v35
    %v37 = vstv %s36
    %v38 = vrcp.pop %v37
    %s39 = vtos %v38
    %s40 = smul.f32 7.5, %s39
    %v41 = vtanh.pop %v21
    %v42 = vstv %s40
    %v43 = vmul.f32 %v41, %v42
    %v44 = vadd.f32 %v43, 7.5
    %v45 = vround.ne.pseudo %v44
    %v46 = vmul.f32 %v45, 0.13333334
    %v47 = vsub.f32 %v46, 1.0
    %48 = vst [vmem:[#allocation5] sm:$0x7] %v47
    // Predicated region
    $region10: #{tpu_custom_call.1} parent=1 // pred_check
      _
    $region11: #{tpu_custom_call.1} parent=1 // pred_check_branch
      %50 = sbr.rel (0) target = $region13
    $region12: #{tpu_custom_call.1} parent=1 // pred_region
      %s52 = ssub.s32 64, 64
      %53 = vsyncadd [#allocation4], %s52
      %s55 = sshll.u32 [#allocation5], 4
      %s56 = int_to_ptr.vmem [resolvable:$true] %s55
      %58 = dma.vmem_to_hbm [thread:$0]  %s56, 64, %s1, [#allocation4]
    $region13: #{tpu_custom_call.1} parent=1 // pred_fallthru
      _
    // Predicated region
    $region14: #{tpu_custom_call.1} parent=1 // pred_check
      _
    $region15: #{tpu_custom_call.1} parent=1 // pred_check_branch
      %60 = sbr.rel (0) target = $region17
    $region16: #{tpu_custom_call.1} parent=1 // pred_region
      %61 = dma.done [#allocation4], 64
    $region17: #{tpu_custom_call.1} parent=1 // pred_fallthru
      _
    %62 = vsyncpa [#allocation3], 1
    %63 = vsyncpa [#allocation4], 1

</llo_original>
